<compile_context>
chip_gen: v7x
topology: tpu7x:2x2x1
jax: 0.10.0
libtpu: 0.0.40
codegen_flags: <defaults>
</compile_context>

<pallas_src>
import functools

import jax
import jax.numpy as jnp
from jax.experimental import pallas as pl
from jax.experimental.pallas import tpu as pltpu


def _dropout_kernel(seed_ref, x_ref, o_ref, *, threshold: int, scale: float,
                    lanes: int, tile_rows: int):
    # Global flat index of every element in this tile (uint32, wraps are fine
    # for hashing purposes).
    base = pl.program_id(0).astype(jnp.uint32) * jnp.uint32(tile_rows * lanes)
    row = jax.lax.broadcasted_iota(jnp.int32, x_ref.shape, 0).astype(jnp.uint32)
    col = jax.lax.broadcasted_iota(jnp.int32, x_ref.shape, 1).astype(jnp.uint32)
    idx = base + row * jnp.uint32(lanes) + col

    # Mix in the seed, then a lowbias32-style integer finalizer (good
    # avalanche, pure VPU int ops).
    seed_u32 = seed_ref[0].astype(jnp.uint32)
    h = idx + seed_u32 * jnp.uint32(0x9E3779B9)
    h = h ^ (h >> 16)
    h = h * jnp.uint32(0x7FEB352D)
    h = h ^ (h >> 15)
    h = h * jnp.uint32(0x846CA68B)
    h = h ^ (h >> 16)

    # Bernoulli(keep_prob) via direct uint32 threshold compare, then a single
    # scale-multiply + select (inverted dropout).
    keep = h < jnp.uint32(threshold)
    x = x_ref[...]
    scaled = x * jnp.asarray(scale, dtype=x.dtype)
    o_ref[...] = jnp.where(keep, scaled, jnp.zeros_like(x))


def dropout(x, p: float = 0.5, seed: int = 0, training: bool = True):
    """Pallas implementation of the PyTorch `Dropout` module forward."""
    if not training or p == 0.0:
        return x
    if p >= 1.0:
        # Everything dropped; avoid 0 * inf = NaN from the 1/(1-p) scale.
        return jnp.zeros_like(x)

    keep_prob = 1.0 - p
    scale = 1.0 / keep_prob
    threshold = min(int(round(keep_prob * 4294967296.0)), 4294967295)

    orig_shape = x.shape
    total = x.size

    # Lane-dense 2-D slab: (rows, LANES) with LANES a multiple of 128.
    LANES = 512
    rows = pl.cdiv(total, LANES)

    # Row tile sized for ~2 MiB (f32) per buffer; multiple of 8 sublanes
    # unless the whole array fits in a single block.
    target_rows = (512 * 1024) // LANES  # 1024 rows
    if rows <= target_rows:
        tile_rows = rows
    else:
        tile_rows = max(8, (target_rows // 8) * 8)

    num_tiles = pl.cdiv(rows, tile_rows)
    padded_rows = num_tiles * tile_rows
    padded_total = padded_rows * LANES

    flat = x.reshape(-1)
    if padded_total != total:
        flat = jnp.pad(flat, (0, padded_total - total))
    x2d = flat.reshape(padded_rows, LANES)

    seed_arr = jnp.asarray([seed], dtype=jnp.int32)

    kernel = functools.partial(
        _dropout_kernel,
        threshold=threshold,
        scale=scale,
        lanes=LANES,
        tile_rows=tile_rows,
    )

    out2d = pl.pallas_call(
        kernel,
        out_shape=jax.ShapeDtypeStruct((padded_rows, LANES), x.dtype),
        grid_spec=pltpu.PrefetchScalarGridSpec(
            num_scalar_prefetch=1,  # the seed lands in SMEM
            grid=(num_tiles,),
            in_specs=[
                pl.BlockSpec((tile_rows, LANES), lambda i, seed_ref: (i, 0)),
            ],
            out_specs=pl.BlockSpec((tile_rows, LANES), lambda i, seed_ref: (i, 0)),
        ),
        compiler_params=pltpu.CompilerParams(
            dimension_semantics=("parallel",),
        ),
    )(seed_arr, x2d)

    return out2d.reshape(-1)[:total].reshape(orig_shape)


if __name__ == "__main__":
    key = jax.random.PRNGKey(0)
    # Small NCHW input consistent with a typical conv-net activation.
    x = jax.random.normal(key, (2, 4, 16, 16), dtype=jnp.float32)

    p = 0.5
    y = dropout(x, p=p, seed=1234, training=True)
    y = jax.block_until_ready(y)

    # Sanity checks on dropout semantics:
    assert y.shape == x.shape and y.dtype == x.dtype
    scale = 1.0 / (1.0 - p)
    # Every output element is either 0 or x * scale.
    close_to_zero = jnp.isclose(y, 0.0)
    close_to_scaled = jnp.isclose(y, x * scale, rtol=1e-5, atol=1e-6)
    assert bool(jnp.all(close_to_zero | close_to_scaled))
    # Keep-rate should be roughly keep_prob (loose bound on a small sample).
    keep_frac = float(jnp.mean((~close_to_zero).astype(jnp.float32)))
    assert 0.3 < keep_frac < 0.7, keep_frac

    # Eval mode is identity.
    y_eval = jax.block_until_ready(dropout(x, p=p, seed=1234, training=False))
    assert bool(jnp.all(y_eval == x))

    # p >= 1.0 drops everything (no NaNs).
    y_all = jax.block_until_ready(dropout(x, p=1.0, seed=1234, training=True))
    assert bool(jnp.all(y_all == 0.0))

    print("KERNEL_OK")
</pallas_src>

<mosaic_0001>
module attributes {stable_mosaic.version = 11 : i64} {
  func.func @_dropout_kernel(%arg0: i32, %arg1: memref<1xi32, #tpu.memory_space<smem>>, %arg2: memref<4x512xf32, #tpu.memory_space<vmem>>, %arg3: memref<4x512xf32, #tpu.memory_space<vmem>>) attributes {dimension_semantics = [#tpu.dimension_semantics<parallel>], iteration_bounds = array<i64: 1>, scalar_prefetch = 1 : i64, scratch_operands = 0 : i64, tpu.core_type = #tpu.core_type<tc>, window_params = [{transform_indices = @transform_0, window_bounds = array<i64: 4, 512>}, {transform_indices = @transform_1, window_bounds = array<i64: 4, 512>}]} {
    %c2048_i32 = arith.constant 2048 : i32
    %0 = arith.muli %arg0, %c2048_i32 : i32
    %1 = tpu.iota {dimensions = array<i32: 0>} : vector<4x512xi32>
    %2 = tpu.iota {dimensions = array<i32: 1>} : vector<4x512xi32>
    %c512_i32 = arith.constant 512 : i32
    %3 = vector.broadcast %c512_i32 : i32 to vector<4x512xi32>
    %4 = arith.muli %1, %3 : vector<4x512xi32>
    %5 = vector.broadcast %0 : i32 to vector<4x512xi32>
    %6 = arith.addi %5, %4 : vector<4x512xi32>
    %7 = arith.addi %6, %2 : vector<4x512xi32>
    %c0 = arith.constant 0 : index
    %8 = memref.load %arg1[%c0] : memref<1xi32, #tpu.memory_space<smem>>
    %c-1640531527_i32 = arith.constant -1640531527 : i32
    %9 = arith.muli %8, %c-1640531527_i32 : i32
    %10 = vector.broadcast %9 : i32 to vector<4x512xi32>
    %11 = arith.addi %7, %10 : vector<4x512xi32>
    %c16_i32 = arith.constant 16 : i32
    %12 = vector.broadcast %c16_i32 : i32 to vector<4x512xi32>
    %13 = arith.shrui %11, %12 : vector<4x512xi32>
    %14 = arith.xori %11, %13 : vector<4x512xi32>
    %c2146121005_i32 = arith.constant 2146121005 : i32
    %15 = vector.broadcast %c2146121005_i32 : i32 to vector<4x512xi32>
    %16 = arith.muli %14, %15 : vector<4x512xi32>
    %c15_i32 = arith.constant 15 : i32
    %17 = vector.broadcast %c15_i32 : i32 to vector<4x512xi32>
    %18 = arith.shrui %16, %17 : vector<4x512xi32>
    %19 = arith.xori %16, %18 : vector<4x512xi32>
    %c-2073254261_i32 = arith.constant -2073254261 : i32
    %20 = vector.broadcast %c-2073254261_i32 : i32 to vector<4x512xi32>
    %21 = arith.muli %19, %20 : vector<4x512xi32>
    %c16_i32_0 = arith.constant 16 : i32
    %22 = vector.broadcast %c16_i32_0 : i32 to vector<4x512xi32>
    %23 = arith.shrui %21, %22 : vector<4x512xi32>
    %24 = arith.xori %21, %23 : vector<4x512xi32>
    %c-2147483648_i32 = arith.constant -2147483648 : i32
    %25 = vector.broadcast %c-2147483648_i32 : i32 to vector<4x512xi32>
    %26 = arith.cmpi ult, %24, %25 : vector<4x512xi32>
    %c0_1 = arith.constant 0 : index
    %c0_2 = arith.constant 0 : index
    %27 = vector.load %arg2[%c0_1, %c0_2] : memref<4x512xf32, #tpu.memory_space<vmem>>, vector<4x512xf32>
    %cst = arith.constant 2.000000e+00 : f32
    %28 = vector.broadcast %cst : f32 to vector<4x512xf32>
    %29 = arith.mulf %27, %28 : vector<4x512xf32>
    %cst_3 = arith.constant 0.000000e+00 : f32
    %30 = vector.broadcast %cst_3 : f32 to vector<4x512xf32>
    %31 = arith.select %26, %29, %30 : vector<4x512xi1>, vector<4x512xf32>
    %c0_4 = arith.constant 0 : index
    %c0_5 = arith.constant 0 : index
    %32 = vector.load %arg3[%c0_4, %c0_5] : memref<4x512xf32, #tpu.memory_space<vmem>>, vector<4x512xf32>
    tpu.vector_store %arg3[%c0_4, %c0_5], %31 {strides = array<i32>} : memref<4x512xf32, #tpu.memory_space<vmem>>, vector<4x512xf32>,
    return
  }
  func.func @transform_0(%arg0: i32, %arg1: memref<1xi32, #tpu.memory_space<smem>>) -> (i32, i32) {
    %c0_i32 = arith.constant 0 : i32
    %c0_i32_0 = arith.constant 0 : i32
    return %arg0, %c0_i32 : i32, i32
  }
  func.func @transform_1(%arg0: i32, %arg1: memref<1xi32, #tpu.memory_space<smem>>) -> (i32, i32) {
    %c0_i32 = arith.constant 0 : i32
    %c0_i32_0 = arith.constant 0 : i32
    return %arg0, %c0_i32 : i32, i32
  }
}

</mosaic_0001>

<llo_original>
// kernel: tpu_custom_call.1
$region0: #{tpu_custom_call.1}
  #allocation0 [shape = 'u32[]', space=smem, size = 0x4, offset = 0x4, fixed_abs, tag = 'smem constant byte address 0x4 - core index']
  #allocation1 [shape = 'u32[144,128]{1,0:T(1,128)}', space=vmem, size = 0x12000, scoped, tag = 'internal scratch']
  #allocation2 [shape = 's32[1]{0}', space=sflag, size = 0x4, scoped, tag = 'scoped memory for tpu_custom_call.1']
  #allocation3 [shape = 's32[1]{0:T(128)S(6)}', space=smem, size = 0x200, scoped, tag = 'prefetched SMEM operand 0']
  %s0 = inlined_call_operand.<no memory space> [shape: s32[1], index: 0, kind: input, shape index: {}]
  %s1 = inlined_call_operand.hbm [shape: f32[4,512], index: 1, kind: input, shape index: {}]
  %s2 = inlined_call_operand.hbm [shape: f32[4,512], index: 2, kind: output, shape index: {}]
  %s3 = sld [smem:[#allocation0]]
  $region18: #{tpu_custom_call.1} parent=0
    _
  %s5 = ssub.s32 1, %s3
  %s6 = scalar_select 0, %s5, %s3
  %7 = sst [smem:[#allocation3]] %s0
  $region1: #{tpu_custom_call.1} parent=0
    #allocation4 [shape = 'u8[8192]{0}', space=vmem, size = 0x2000, scoped, tag = 'input window, operand 1, single buffered']
    #allocation5 [shape = 's32[1]{0}', space=sflag, size = 0x4, scoped, tag = 'scoped memory for tpu_custom_call.1']
    #allocation6 [shape = 's32[1]{0}', space=sflag, size = 0x4, scoped, tag = 'scoped memory for tpu_custom_call.1']
    #allocation7 [shape = 'u8[8192]{0}', space=vmem, size = 0x2000, scoped, tag = 'output window, operand 0, single buffered']
    %8 = vsyncpa [#allocation5], 0
    %9 = vsyncpa [#allocation6], 0
    // Predicated region
    $region2: #{tpu_custom_call.1} parent=1 // pred_check
      _
    $region3: #{tpu_custom_call.1} parent=1 // pred_check_branch
      %11 = sbr.rel (0) target = $region5
    $region4: #{tpu_custom_call.1} parent=1 // pred_region
      %s13 = ssub.s32 256, 256
      %14 = vsyncadd [#allocation5], %s13
      %s16 = sshll.u32 [#allocation4], 4
      %s17 = int_to_ptr.vmem [resolvable:$true] %s16
      %19 = dma.hbm_to_vmem [thread:$0]  %s1, 256, %s17, [#allocation5]
    $region5: #{tpu_custom_call.1} parent=1 // pred_fallthru
      _
    // Predicated region
    $region6: #{tpu_custom_call.1} parent=1 // pred_check
      _
    $region7: #{tpu_custom_call.1} parent=1 // pred_check_branch
      %21 = sbr.rel (0) target = $region9
    $region8: #{tpu_custom_call.1} parent=1 // pred_region
      %22 = dma.done [#allocation5], 256
    $region9: #{tpu_custom_call.1} parent=1 // pred_fallthru
      _
    %s23 = smul.u32 0, 2048
    %v24 = vlaneseq
    %v25 = vshrl.u32 %v24, 7
    %v26 = vlaneseq
    %v27 = vand.u32 %v26, 127
    %v28 = vadd.s32 %v27, 128
    %v29 = vadd.s32 %v27, 256
    %v30 = vadd.s32 %v27, 384
    %v31 = vmul.u32 %v25, 512
    %v32 = vstv %s23
    %v33 = vadd.s32 %v32, %v31
    %v34 = vadd.s32 %v33, %v27
    %v35 = vadd.s32 %v33, %v28
    %v36 = vadd.s32 %v33, %v29
    %v37 = vadd.s32 %v33, %v30
    %s38 = sld [smem:[#allocation3]]
    %s39 = smul.u32 %s38, 2654435769
    %v40 = vstv %s39
    %v41 = vadd.s32 %v34, %v40
    %v42 = vadd.s32 %v35, %v40
    %v43 = vadd.s32 %v36, %v40
    %v44 = vadd.s32 %v37, %v40
    %v45 = vshrl.u32 %v41, 16
    %v46 = vshrl.u32 %v42, 16
    %v47 = vshrl.u32 %v43, 16
    %v48 = vshrl.u32 %v44, 16
    %v49 = vxor.u32 %v41, %v45
    %v50 = vxor.u32 %v42, %v46
    %v51 = vxor.u32 %v43, %v47
    %v52 = vxor.u32 %v44, %v48
    %v53 = vmul.u32 %v49, 2146121005
    %v54 = vmul.u32 %v50, 2146121005
    %v55 = vmul.u32 %v51, 2146121005
    %v56 = vmul.u32 %v52, 2146121005
    %v57 = vshrl.u32 %v53, 15
    %v58 = vshrl.u32 %v54, 15
    %v59 = vshrl.u32 %v55, 15
    %v60 = vshrl.u32 %v56, 15
    %v61 = vxor.u32 %v53, %v57
    %v62 = vxor.u32 %v54, %v58
    %v63 = vxor.u32 %v55, %v59
    %v64 = vxor.u32 %v56, %v60
    %v65 = vmul.u32 %v61, 2221713035
    %v66 = vmul.u32 %v62, 2221713035
    %v67 = vmul.u32 %v63, 2221713035
    %v68 = vmul.u32 %v64, 2221713035
    %v69 = vshrl.u32 %v65, 16
    %v70 = vshrl.u32 %v66, 16
    %v71 = vshrl.u32 %v67, 16
    %v72 = vshrl.u32 %v68, 16
    %v73 = vxor.u32 %v65, %v69
    %v74 = vxor.u32 %v66, %v70
    %v75 = vxor.u32 %v67, %v71
    %v76 = vxor.u32 %v68, %v72
    %vm77 = vcmp.lt.u32.totalorder %v73, 2147483648
    %vm78 = vcmp.lt.u32.totalorder %v74, 2147483648
    %vm79 = vcmp.lt.u32.totalorder %v75, 2147483648
    %vm80 = vcmp.lt.u32.totalorder %v76, 2147483648
    %v81 = vld [vmem:[#allocation4] sm:$0xff]
    %v82 = vld [vmem:[#allocation4 + $0x8] sm:$0xff]
    %v83 = vmul.f32 %v81, 2.0
    %v84 = vmul.f32 %v82, 2.0
    %v87 = vcombine.high %v83, %v83
    %v88 = vcombine.high %v84, %v84
    %v91 = vsel %vm77, %v83, 0.0
    %v92 = vsel %vm78, %v87, 0.0
    %v93 = vsel %vm79, %v84, 0.0
    %v94 = vsel %vm80, %v88, 0.0
    %v99 = vcombine.low %v91, %v92
    %v100 = vcombine.low %v93, %v94
    %103 = vst [vmem:[#allocation7] sm:$0xff] %v99
    %104 = vst [vmem:[#allocation7 + $0x8] sm:$0xff] %v100
    // Predicated region
    $region10: #{tpu_custom_call.1} parent=1 // pred_check
      _
    $region11: #{tpu_custom_call.1} parent=1 // pred_check_branch
      %106 = sbr.rel (0) target = $region13
    $region12: #{tpu_custom_call.1} parent=1 // pred_region
      %s108 = ssub.s32 256, 256
      %109 = vsyncadd [#allocation6], %s108
      %s111 = sshll.u32 [#allocation7], 4
      %s112 = int_to_ptr.vmem [resolvable:$true] %s111
      %114 = dma.vmem_to_hbm [thread:$0]  %s112, 256, %s2, [#allocation6]
    $region13: #{tpu_custom_call.1} parent=1 // pred_fallthru
      _
    // Predicated region
    $region14: #{tpu_custom_call.1} parent=1 // pred_check
      _
    $region15: #{tpu_custom_call.1} parent=1 // pred_check_branch
      %116 = sbr.rel (0) target = $region17
    $region16: #{tpu_custom_call.1} parent=1 // pred_region
      %117 = dma.done [#allocation6], 256
    $region17: #{tpu_custom_call.1} parent=1 // pred_fallthru
      _
    %118 = vsyncpa [#allocation5], 1
    %119 = vsyncpa [#allocation6], 1

</llo_original>
